<compile_context>
chip_gen: v5e
topology: v5e:2x2
jax: 0.10.0
libtpu: 0.0.40
codegen_flags: <defaults>
</compile_context>

<pallas_src>
import jax
import jax.numpy as jnp
from jax.experimental import pallas as pl
from jax.experimental.pallas import tpu as pltpu

LANES = 128
SUBLANES = 8
MAX_ROW_TILE = 1024  # rows per grid step (multiple of 8); 512 KiB f32 per input tile


def _xlogy(x, y):
    # torch.special.xlogy: result is 0 where x == 0 (even if y <= 0).
    # The discarded branch may produce inf/nan; jnp.where masks it out.
    return jnp.where(x == 0.0, 0.0, x * jnp.log(y))


def _nll_partial_kernel(labels_ref, output_ref, o_ref):
    """Per-block lane-wise partial sum of -xlogy(l, o) - xlogy(1-l, 1-o)."""
    lab = labels_ref[...].astype(jnp.float32)
    out = output_ref[...].astype(jnp.float32)
    term = -_xlogy(lab, out) - _xlogy(1.0 - lab, 1.0 - out)
    # Reduce over the row (sublane) axis only -> (1, 128) lane-dense partial.
    o_ref[...] = jnp.sum(term, axis=0, keepdims=True)


def _round_up(x, m):
    return -(-x // m) * m


@jax.jit
def nll_loss(labels, output):
    """Pallas implementation of NLLLoss.forward(labels, output) -> scalar f32."""
    n_elem = labels.size

    # Flatten (free for contiguous inputs); keep native dtype until in-kernel.
    flat_l = labels.reshape(-1)
    flat_o = output.reshape(-1)

    rows_min = -(-n_elem // LANES)
    row_tile = min(MAX_ROW_TILE, _round_up(rows_min, SUBLANES))
    rows_total = _round_up(rows_min, row_tile)
    pad = rows_total * LANES - n_elem
    if pad:
        # Zero padding contributes exactly 0 to the sum:
        #   -xlogy(0, 0) - xlogy(1, 1) == 0   (x == 0 convention in _xlogy).
        flat_l = jnp.pad(flat_l, (0, pad))
        flat_o = jnp.pad(flat_o, (0, pad))

    slab_l = flat_l.reshape(rows_total, LANES)
    slab_o = flat_o.reshape(rows_total, LANES)

    num_blocks = rows_total // row_tile
    tile_spec = pl.BlockSpec((row_tile, LANES), lambda i: (i, 0))

    partials = pl.pallas_call(
        _nll_partial_kernel,
        out_shape=jax.ShapeDtypeStruct((num_blocks, LANES), jnp.float32),
        grid_spec=pltpu.PrefetchScalarGridSpec(
            num_scalar_prefetch=0,
            grid=(num_blocks,),
            in_specs=[tile_spec, tile_spec],
            out_specs=pl.BlockSpec((1, LANES), lambda i: (i, 0)),
        ),
        compiler_params=pltpu.CompilerParams(
            dimension_semantics=("parallel",)  # independent blocks; megacore-friendly
        ),
    )(slab_l, slab_o)

    # mean(mean(x)) over the full tensor == sum / numel. Tiny final reduce in JAX.
    return jnp.sum(partials) / jnp.float32(n_elem)


def _reference(labels, output):
    labels = labels.astype(jnp.float32)
    output = output.astype(jnp.float32)
    return jnp.mean(-_xlogy(labels, output) - _xlogy(1.0 - labels, 1.0 - output))


if __name__ == "__main__":
    key = jax.random.PRNGKey(0)
    k1, k2 = jax.random.split(key)
    shape = (2, 4, 16, 16)  # NCHW-style small example
    # labels in {0, 1}, output (predicted probabilities) in (0, 1)
    labels = (jax.random.uniform(k1, shape) > 0.5).astype(jnp.float32)
    output = jax.random.uniform(k2, shape, minval=0.01, maxval=0.99)

    loss = nll_loss(labels, output)
    jax.block_until_ready(loss)

    ref = _reference(labels, output)
    assert jnp.allclose(loss, ref, rtol=1e-5, atol=1e-6), (loss, ref)
    print("KERNEL_OK")
</pallas_src>

<mosaic_0001>
module attributes {stable_mosaic.version = 11 : i64} {
  func.func @_nll_partial_kernel(%arg0: i32, %arg1: memref<16x128xf32, #tpu.memory_space<vmem>>, %arg2: memref<16x128xf32, #tpu.memory_space<vmem>>, %arg3: memref<1x128xf32, #tpu.memory_space<vmem>>) attributes {dimension_semantics = [#tpu.dimension_semantics<parallel>], iteration_bounds = array<i64: 1>, scalar_prefetch = 0 : i64, scratch_operands = 0 : i64, tpu.core_type = #tpu.core_type<tc>, window_params = [{transform_indices = @transform_0, window_bounds = array<i64: 16, 128>}, {transform_indices = @transform_1, window_bounds = array<i64: 16, 128>}, {transform_indices = @transform_2, window_bounds = array<i64: 1, 128>}]} {
    %c0 = arith.constant 0 : index
    %c0_0 = arith.constant 0 : index
    %0 = vector.load %arg1[%c0, %c0_0] : memref<16x128xf32, #tpu.memory_space<vmem>>, vector<16x128xf32>
    %c0_1 = arith.constant 0 : index
    %c0_2 = arith.constant 0 : index
    %1 = vector.load %arg2[%c0_1, %c0_2] : memref<16x128xf32, #tpu.memory_space<vmem>>, vector<16x128xf32>
    %cst = arith.constant 0.000000e+00 : f32
    %2 = vector.broadcast %cst : f32 to vector<16x128xf32>
    %3 = arith.cmpf oeq, %0, %2 : vector<16x128xf32>
    %4 = math.log %1 : vector<16x128xf32>
    %5 = arith.mulf %0, %4 : vector<16x128xf32>
    %cst_3 = arith.constant 0.000000e+00 : f32
    %6 = vector.broadcast %cst_3 : f32 to vector<16x128xf32>
    %7 = arith.select %3, %6, %5 : vector<16x128xi1>, vector<16x128xf32>
    %cst_4 = arith.constant 0.000000e+00 : f32
    %8 = vector.broadcast %cst_4 : f32 to vector<16x128xf32>
    %9 = arith.subf %8, %7 : vector<16x128xf32>
    %cst_5 = arith.constant 1.000000e+00 : f32
    %10 = vector.broadcast %cst_5 : f32 to vector<16x128xf32>
    %11 = arith.subf %10, %0 : vector<16x128xf32>
    %cst_6 = arith.constant 1.000000e+00 : f32
    %12 = vector.broadcast %cst_6 : f32 to vector<16x128xf32>
    %13 = arith.subf %12, %1 : vector<16x128xf32>
    %cst_7 = arith.constant 0.000000e+00 : f32
    %14 = vector.broadcast %cst_7 : f32 to vector<16x128xf32>
    %15 = arith.cmpf oeq, %11, %14 : vector<16x128xf32>
    %16 = math.log %13 : vector<16x128xf32>
    %17 = arith.mulf %11, %16 : vector<16x128xf32>
    %cst_8 = arith.constant 0.000000e+00 : f32
    %18 = vector.broadcast %cst_8 : f32 to vector<16x128xf32>
    %19 = arith.select %15, %18, %17 : vector<16x128xi1>, vector<16x128xf32>
    %20 = arith.subf %9, %19 : vector<16x128xf32>
    %cst_9 = arith.constant dense<0.000000e+00> : vector<128xf32>
    %21 = vector.multi_reduction <add>, %20, %cst_9 [0] : vector<16x128xf32> to vector<128xf32>
    %22 = vector.shape_cast %21 : vector<128xf32> to vector<1x128xf32>
    %c0_10 = arith.constant 0 : index
    %c0_11 = arith.constant 0 : index
    %23 = vector.load %arg3[%c0_10, %c0_11] : memref<1x128xf32, #tpu.memory_space<vmem>>, vector<1x128xf32>
    tpu.vector_store %arg3[%c0_10, %c0_11], %22 {strides = array<i32>} : memref<1x128xf32, #tpu.memory_space<vmem>>, vector<1x128xf32>,
    return
  }
  func.func @transform_0(%arg0: i32) -> (i32, i32) {
    %c0_i32 = arith.constant 0 : i32
    %c0_i32_0 = arith.constant 0 : i32
    return %arg0, %c0_i32 : i32, i32
  }
  func.func @transform_1(%arg0: i32) -> (i32, i32) {
    %c0_i32 = arith.constant 0 : i32
    %c0_i32_0 = arith.constant 0 : i32
    return %arg0, %c0_i32 : i32, i32
  }
  func.func @transform_2(%arg0: i32) -> (i32, i32) {
    %c0_i32 = arith.constant 0 : i32
    %c0_i32_0 = arith.constant 0 : i32
    return %arg0, %c0_i32 : i32, i32
  }
}

</mosaic_0001>

<llo_original>
// kernel: nll_loss.1
$region0: #{nll_loss.1}
  #allocation0 [shape = 'u32[]', space=smem, size = 0x4, offset = 0x4, fixed_abs, tag = 'smem constant byte address 0x4 - core index']
  #allocation1 [shape = 'u32[72,128]{1,0:T(1,128)}', space=vmem, size = 0x9000, scoped, tag = 'internal scratch']
  %s0 = inlined_call_operand.vmem [shape: f32[16,128], index: 0, kind: input, shape index: {}]
  %s1 = inlined_call_operand.vmem [shape: f32[16,128], index: 1, kind: input, shape index: {}]
  %s2 = inlined_call_operand.vmem [shape: f32[1,128], index: 2, kind: output, shape index: {}]
  %s3 = sld [smem:[#allocation0]]
  $region18: #{nll_loss.1} parent=0
    _
  %s5 = ssub.s32 1, %s3
  %s6 = scalar_select 0, %s5, %s3
  // Predicated region
  $region2: #{nll_loss.1} parent=0 // pred_check
    _
  $region3: #{nll_loss.1} parent=0 // pred_check_branch
    %8 = sbr.rel (0) target = $region5
  $region4: #{nll_loss.1} parent=0 // pred_region
    _
  $region5: #{nll_loss.1} parent=0 // pred_fallthru
    _
  // Predicated region
  $region6: #{nll_loss.1} parent=0 // pred_check
    _
  $region7: #{nll_loss.1} parent=0 // pred_check_branch
    %10 = sbr.rel (0) target = $region9
  $region8: #{nll_loss.1} parent=0 // pred_region
    _
  $region9: #{nll_loss.1} parent=0 // pred_fallthru
    _
  %v11 = vld [vmem:[%s0] sm:$0xff]
  %v12 = vld [vmem:[%s0 + $0x8] sm:$0xff]
  %v13 = vld [vmem:[%s1] sm:$0xff]
  %v14 = vld [vmem:[%s1 + $0x8] sm:$0xff]
  %vm15 = vcmp.eq.f32.partialorder %v11, 0.0
  %vm16 = vcmp.eq.f32.partialorder %v12, 0.0
  %v17 = vlog2.pop %v13
  %v18 = vmul.f32 %v17, 0.6931472
  %v19 = vlog2.pop %v14
  %v20 = vmul.f32 %v19, 0.6931472
  %v21 = vmul.f32 %v11, %v18
  %v22 = vmul.f32 %v12, %v20
  %v23 = vsel %vm15, 0.0, %v21
  %v24 = vsel %vm16, 0.0, %v22
  %v25 = vsub.f32 0.0, %v23
  %v26 = vsub.f32 0.0, %v24
  %v27 = vsub.f32 1.0, %v11
  %v28 = vsub.f32 1.0, %v12
  %v29 = vsub.f32 1.0, %v13
  %v30 = vsub.f32 1.0, %v14
  %vm31 = vcmp.eq.f32.partialorder %v27, 0.0
  %vm32 = vcmp.eq.f32.partialorder %v28, 0.0
  %v33 = vlog2.pop %v29
  %v34 = vmul.f32 %v33, 0.6931472
  %v35 = vlog2.pop %v30
  %v36 = vmul.f32 %v35, 0.6931472
  %v37 = vmul.f32 %v27, %v34
  %v38 = vmul.f32 %v28, %v36
  %v39 = vsel %vm31, 0.0, %v37
  %v40 = vsel %vm32, 0.0, %v38
  %v41 = vsub.f32 %v25, %v39
  %v42 = vsub.f32 %v26, %v40
  %v43 = vadd.f32 %v41, %v42
  %v44 = vrot.slane %v43, 4
  %v45 = vadd.f32 %v43, %v44
  %v46 = vrot.slane %v45, 2
  %v47 = vadd.f32 %v45, %v46
  %v48 = vrot.slane %v47, 1
  %v49 = vadd.f32 %v47, %v48
  %50 = vst [vmem:[%s2] sm:$0x1] %v49
  // Predicated region
  $region10: #{nll_loss.1} parent=0 // pred_check
    _
  $region11: #{nll_loss.1} parent=0 // pred_check_branch
    %52 = sbr.rel (0) target = $region13
  $region12: #{nll_loss.1} parent=0 // pred_region
    _
  $region13: #{nll_loss.1} parent=0 // pred_fallthru
    _
  // Predicated region
  $region14: #{nll_loss.1} parent=0 // pred_check
    _
  $region15: #{nll_loss.1} parent=0 // pred_check_branch
    %54 = sbr.rel (0) target = $region17
  $region16: #{nll_loss.1} parent=0 // pred_region
    _
  $region17: #{nll_loss.1} parent=0 // pred_fallthru
    _

</llo_original>
